<compile_context>
chip_gen: v7x
topology: tpu7x:2x2x1
jax: 0.10.0
libtpu: 0.0.40
codegen_flags: <defaults>
</compile_context>

<pallas_src>
import jax
import jax.numpy as jnp
from jax.experimental import pallas as pl
from jax.experimental.pallas import tpu as pltpu


def _round_up(x, m):
    return ((x + m - 1) // m) * m


def _cdiv(a, b):
    return (a + b - 1) // b


def _physical_vmem_bytes():
    """Per-TensorCore physical VMEM, with conservative fallbacks."""
    try:
        return int(pltpu.get_tpu_info().vmem_capacity_bytes)
    except Exception:
        pass
    try:
        kind = jax.devices()[0].device_kind.lower()
    except Exception:
        kind = ""
    if "v7" in kind:
        return 64 << 20       # v7x: 64 MiB / TC
    if "v5" in kind or "v6" in kind:
        return 128 << 20      # v5e / v5p / v6e: 128 MiB
    return 64 << 20           # safe lower bound


def _num_tensorcores():
    """TensorCores sharing one chip's grid ('parallel' axes shard across them)."""
    try:
        kind = jax.devices()[0].device_kind.lower()
    except Exception:
        kind = ""
    return 2 if ("v7" in kind or "v4" in kind or "v5p" in kind) else 1


def _choose_tiles(S, Cin, Cout, in_itemsize, vmem_budget, *, max_ts=16384):
    """Pick (tco, ts): output-channel tile and lane-dense spatial tile.

    Budget counts Pallas' default double-buffering (2x) for every operand,
    including the grid-resident weight/bias.
    """
    bias_item = 4  # bias kept in f32

    def bytes_needed(tco, ts):
        weight = 2 * tco * (Cin * in_itemsize + bias_item)        # W + bias, 2 bufs
        tiles = 2 * (Cin + tco) * ts * in_itemsize                # x tile + out tile, 2 bufs
        return weight + tiles

    # Output-channel tile: keep the full weight resident when it fits,
    # otherwise tile Cout in multiples of 8 (extra parallel grid axis).
    tco = Cout
    if Cout > 8 and bytes_needed(tco, 128) > vmem_budget:
        tco = (Cout // 8) * 8
        while tco > 8 and bytes_needed(tco, 128) > vmem_budget:
            tco -= 8

    # Spatial tile: the largest 128-multiple that fits the budget.
    if S <= 128:
        ts = S                      # block equals the full (short) lane dim
    else:
        ts = min(_round_up(max_ts, 128), _round_up(S, 128))
        while ts > 128 and bytes_needed(tco, ts) > vmem_budget:
            ts -= 128
    return tco, ts


def _linear_chw_kernel(x_ref, w_ref, b_ref, o_ref):
    # x_ref: (Cin, ts)   one batch element, one spatial tile (lanes = spatial)
    # w_ref: (tco, Cin)  PyTorch-layout weight tile, resident across b/s axes
    # b_ref: (tco, 1)    f32 bias column
    # o_ref: (tco, ts)   lane-dense output tile (already NCHW layout)
    #
    # NOTE: for very large Cin with strict f32 tolerances, pass
    # precision=lax.Precision.HIGHEST here; default precision already meets
    # 1e-5 at these sizes.
    acc = jnp.dot(w_ref[...], x_ref[...], preferred_element_type=jnp.float32)
    o_ref[...] = (acc + b_ref[...]).astype(o_ref.dtype)


@jax.jit
def einops_wrapped_linear(x_nchw, weight, bias):
    """EinopsWrapper('b c h w', 'b (h w) c', nn.Linear(Cin, Cout)) forward.

    x_nchw: (B, Cin, H, W); weight: (Cout, Cin) PyTorch layout; bias: (Cout,)
    returns (B, Cout, H, W).
    """
    B, Cin, H, W = x_nchw.shape
    Cout = weight.shape[0]
    S = H * W
    itemsize = x_nchw.dtype.itemsize

    phys_vmem = _physical_vmem_bytes()
    # Scoped VMEM limit we request from Mosaic; leave headroom for internal scratch.
    vmem_limit = min(phys_vmem * 3 // 4, 100 << 20)
    budget = vmem_limit - (2 << 20)

    tco, ts = _choose_tiles(S, Cin, Cout, itemsize, budget)

    # Keep >= 2 balanced parallel grid steps on multi-TensorCore chips (v7x).
    if _num_tensorcores() > 1 and S > 128:
        if B * _cdiv(Cout, tco) * _cdiv(S, ts) < 2:
            ts = max(128, _round_up(_cdiv(S, 2), 128))

    n_co = _cdiv(Cout, tco)
    n_s = _cdiv(S, ts)

    # (B, C, H, W) -> (B, C, S): trailing-dim reshape, no data movement.
    x_bcs = x_nchw.reshape(B, Cin, S)
    w2d = weight.astype(x_nchw.dtype)                   # (Cout, Cin)
    b2d = bias.reshape(Cout, 1).astype(jnp.float32)     # f32, added to f32 acc

    # TODO(synk): for very large Cin where bf16 accuracy is acceptable, cast
    # x_bcs / w2d to bf16 here (acc stays f32) for ~2x MXU throughput on v6e/v7x.

    cost = pl.CostEstimate(
        flops=2 * B * Cout * Cin * S,
        transcendentals=0,
        bytes_accessed=(B * (Cin + Cout) * S + Cout * Cin) * itemsize + Cout * 4,
    )

    y_bcs = pl.pallas_call(
        _linear_chw_kernel,
        out_shape=jax.ShapeDtypeStruct((B, Cout, S), x_nchw.dtype),
        grid_spec=pltpu.PrefetchScalarGridSpec(
            num_scalar_prefetch=0,
            grid=(B, n_co, n_s),
            in_specs=[
                # one batch element, (Cin, ts) tile: channels on sublanes, spatial on lanes
                pl.BlockSpec((None, Cin, ts), lambda b, co, s: (b, 0, s)),
                # weight / bias: resident across batch & spatial axes, tiled over Cout
                pl.BlockSpec((tco, Cin), lambda b, co, s: (co, 0)),
                pl.BlockSpec((tco, 1), lambda b, co, s: (co, 0)),
            ],
            out_specs=pl.BlockSpec((None, tco, ts), lambda b, co, s: (b, co, s)),
        ),
        compiler_params=pltpu.CompilerParams(
            # No reduction grid axis (Cin stays resident) -> fully parallel grid.
            dimension_semantics=("parallel", "parallel", "parallel"),
            vmem_limit_bytes=vmem_limit,
        ),
        cost_estimate=cost,
    )(x_bcs, w2d, b2d)

    # (B, Cout, S) is already NCHW; trailing reshape is free.
    return y_bcs.reshape(B, Cout, H, W)


if __name__ == "__main__":
    key = jax.random.PRNGKey(0)
    kx, kw, kb = jax.random.split(key, 3)

    B, C, H, W = 2, 8, 16, 16
    x = jax.random.normal(kx, (B, C, H, W), dtype=jnp.float32)

    # PyTorch-style Linear(C, C) params: uniform(-1/sqrt(C), 1/sqrt(C)), weight (out, in).
    bound = 1.0 / (C ** 0.5)
    weight = jax.random.uniform(kw, (C, C), jnp.float32, -bound, bound)  # (Cout, Cin)
    bias = jax.random.uniform(kb, (C,), jnp.float32, -bound, bound)

    out = einops_wrapped_linear(x, weight, bias)
    out = jax.block_until_ready(out)

    # Pure-JAX reference of the full EinopsWrapper forward.
    ref = jnp.einsum('bchw,oc->bohw', x, weight) + bias[None, :, None, None]
    assert out.shape == (B, C, H, W)
    assert jnp.allclose(out, ref, atol=1e-5, rtol=1e-5)

    print("KERNEL_OK")
</pallas_src>

<mosaic_0001>
module attributes {stable_mosaic.version = 11 : i64} {
  func.func @_linear_chw_kernel(%arg0: i32, %arg1: i32, %arg2: i32, %arg3: memref<1x8x256xf32, #tpu.memory_space<vmem>>, %arg4: memref<8x8xf32, #tpu.memory_space<vmem>>, %arg5: memref<8x1xf32, #tpu.memory_space<vmem>>, %arg6: memref<1x8x256xf32, #tpu.memory_space<vmem>>) attributes {dimension_semantics = [#tpu.dimension_semantics<parallel>, #tpu.dimension_semantics<parallel>, #tpu.dimension_semantics<parallel>], iteration_bounds = array<i64: 2, 1, 1>, scalar_prefetch = 0 : i64, scratch_operands = 0 : i64, tpu.core_type = #tpu.core_type<tc>, window_params = [{transform_indices = @transform_0, window_bounds = array<i64: 1, 8, 256>}, {transform_indices = @transform_1, window_bounds = array<i64: 8, 8>}, {transform_indices = @transform_2, window_bounds = array<i64: 8, 1>}, {transform_indices = @transform_3, window_bounds = array<i64: 1, 8, 256>}]} {
    %c0 = arith.constant 0 : index
    %c0_0 = arith.constant 0 : index
    %0 = vector.load %arg4[%c0, %c0_0] : memref<8x8xf32, #tpu.memory_space<vmem>>, vector<8x8xf32>
    %c0_1 = arith.constant 0 : index
    %c0_2 = arith.constant 0 : index
    %c0_3 = arith.constant 0 : index
    %1 = vector.load %arg3[%c0_1, %c0_2, %c0_3] : memref<1x8x256xf32, #tpu.memory_space<vmem>>, vector<1x8x256xf32>
    %2 = vector.shape_cast %1 : vector<1x8x256xf32> to vector<8x256xf32>
    %cst = arith.constant dense<0.000000e+00> : vector<8x256xf32>
    %3 = tpu.matmul %0, %2, %cst {dimension_numbers = #tpu.dot_dimension_numbers<[1], [0], [0], [1], [0, 0, 1, 1], [], []>} : vector<8x8xf32>, vector<8x256xf32>, vector<8x256xf32> -> vector<8x256xf32>
    %c0_4 = arith.constant 0 : index
    %c0_5 = arith.constant 0 : index
    %4 = vector.load %arg5[%c0_4, %c0_5] : memref<8x1xf32, #tpu.memory_space<vmem>>, vector<8x1xf32>
    %5 = vector.broadcast %4 : vector<8x1xf32> to vector<8x256xf32>
    %6 = arith.addf %3, %5 : vector<8x256xf32>
    %c0_6 = arith.constant 0 : index
    %c0_7 = arith.constant 0 : index
    %c0_8 = arith.constant 0 : index
    %7 = vector.load %arg6[%c0_6, %c0_7, %c0_8] : memref<1x8x256xf32, #tpu.memory_space<vmem>>, vector<1x8x256xf32>
    %8 = vector.shape_cast %7 : vector<1x8x256xf32> to vector<8x256xf32>
    %9 = vector.shape_cast %6 : vector<8x256xf32> to vector<1x8x256xf32>
    tpu.vector_store %arg6[%c0_6, %c0_7, %c0_8], %9 {strides = array<i32>} : memref<1x8x256xf32, #tpu.memory_space<vmem>>, vector<1x8x256xf32>,
    return
  }
  func.func @transform_0(%arg0: i32, %arg1: i32, %arg2: i32) -> (i32, i32, i32) {
    %c0_i32 = arith.constant 0 : i32
    %c0_i32_0 = arith.constant 0 : i32
    return %arg0, %c0_i32, %arg2 : i32, i32, i32
  }
  func.func @transform_1(%arg0: i32, %arg1: i32, %arg2: i32) -> (i32, i32) {
    %c0_i32 = arith.constant 0 : i32
    %c0_i32_0 = arith.constant 0 : i32
    return %arg1, %c0_i32 : i32, i32
  }
  func.func @transform_2(%arg0: i32, %arg1: i32, %arg2: i32) -> (i32, i32) {
    %c0_i32 = arith.constant 0 : i32
    %c0_i32_0 = arith.constant 0 : i32
    return %arg1, %c0_i32 : i32, i32
  }
  func.func @transform_3(%arg0: i32, %arg1: i32, %arg2: i32) -> (i32, i32, i32) {
    %c0_i32 = arith.constant 0 : i32
    return %arg0, %arg1, %arg2 : i32, i32, i32
  }
}

</mosaic_0001>

<llo_original>
// kernel: einops_wrapped_linear.1
$region0: #{einops_wrapped_linear.1}
  #allocation0 [shape = 'u32[]', space=smem, size = 0x4, offset = 0x4, fixed_abs, tag = 'smem constant byte address 0x4 - core index']
  #allocation1 [shape = 'u32[144,128]{1,0:T(1,128)}', space=vmem, size = 0x12000, scoped, tag = 'internal scratch']
  %s0 = inlined_call_operand.vmem [shape: f32[2,8,256], index: 0, kind: input, shape index: {}]
  %s1 = inlined_call_operand.vmem [shape: f32[8,8], index: 1, kind: input, shape index: {}]
  %s2 = inlined_call_operand.vmem [shape: f32[8,1], index: 2, kind: input, shape index: {}]
  %s3 = inlined_call_operand.vmem [shape: f32[2,8,256], index: 3, kind: output, shape index: {}]
  %s4 = sld [smem:[#allocation0]]
  $region45: #{einops_wrapped_linear.1} parent=0
    _
  %s6 = ssub.s32 1, %s4
  %s7 = scalar_select 0, %s6, %s4
  loop: start=0, step=1, limit=4
  $region2: #{einops_wrapped_linear.1} parent=0 // loop_pre_header
    _
  $region3: #{einops_wrapped_linear.1} parent=0 // loop_header
    %s9 = sphi 0, %s13
    %p10 = scmp.ge.s32.totalorder %s9, 4
    %s16 = sphi 0, %s35
    %s17 = sphi 0, %s31
    %s18 = sphi 0, %s27
    %s19 = sphi 0, %s16
    %s20 = sphi 0, %s17
    %s21 = sphi 0, %s18
    %s22 = sphi 0, %s19
    %s23 = sphi 0, %s20
    %s24 = sphi 0, %s21
    %s40 = sphi 0, %s42
    %s43 = sphi 0, %s40
    %s44 = sphi 0, %s43
    %s60 = sphi 0, %s44
    %s66 = sphi 0, %s68
    %s69 = sphi 0, %s66
    %s70 = sphi 0, %s69
    %s86 = sphi 0, %s70
    %s92 = sphi 0, %s94
    %s95 = sphi 0, %s92
    %s96 = sphi 0, %s95
    %s112 = sphi 0, %s96
    %s122 = sphi 0, %s124
    %s125 = sphi 0, %s122
    %s126 = sphi 0, %s125
    %s142 = sphi 0, %s126
  $region4: #{einops_wrapped_linear.1} parent=0 // loop_header_branch
    %12 = sbr.rel (%p10) target = $region8
  $region5: #{einops_wrapped_linear.1} parent=0 // loop_body
    %s14 = ssub.s32 %s9, 1
    %s15 = ssub.s32 %s9, 2
    %s25 = sadd.s32 1, %s18
    %p26 = scmp.ge.s32.totalorder %s25, 1
    %s27 = scalar_select %p26, 0, %s25
    %s28 = sadd.s32 1, %s17
    %s29 = scalar_select %p26, %s28, %s17
    %p30 = scmp.ge.s32.totalorder %s29, 1
    %s31 = scalar_select %p30, 0, %s29
    %s32 = sadd.s32 1, %s16
    %s33 = scalar_select %p30, %s32, %s16
    %p34 = scmp.ge.s32.totalorder %s33, 2
    %s35 = scalar_select %p34, 0, %s33
    %s36 = ssub.s32 %s16, %s35
    %s37 = ssub.s32 %s18, %s27
    %s38 = sor.u32 %s36, %s37
    %p39 = scmp.eq.s32.totalorder %s38, 0
    %s41 = sadd.s32 %s40, 1
    %s42 = scalar_select %p39, %s40, %s41
    %p45 = pneg %p39
    %p46 = scmp.eq.s32.totalorder %s9, 1
    %p47 = por %p45, %p46
    %p48 = scmp.ne.s32.totalorder %s40, %s43
    %p49 = scmp.eq.s32.totalorder %s9, 0
    %p50 = por %p48, %p49
    %p51 = scmp.ne.s32.totalorder %s40, %s43
    %p52 = scmp.eq.s32.totalorder %s14, 1
    %p53 = por %p51, %p52
    %p54 = scmp.ne.s32.totalorder %s43, %s44
    %p55 = scmp.eq.s32.totalorder %s14, 0
    %p56 = por %p54, %p55
    %p57 = scmp.ne.s32.totalorder %s43, %s44
    %p58 = scmp.eq.s32.totalorder %s15, 1
    %p59 = por %p57, %p58
    %p61 = scmp.ne.s32.totalorder %s44, %s60
    %p62 = scmp.eq.s32.totalorder %s15, 0
    %p63 = por %p61, %p62
    %s64 = ssub.s32 %s17, %s31
    %p65 = scmp.eq.s32.totalorder %s64, 0
    %s67 = sadd.s32 %s66, 1
    %s68 = scalar_select %p65, %s66, %s67
    %p71 = pneg %p65
    %p72 = scmp.eq.s32.totalorder %s9, 1
    %p73 = por %p71, %p72
    %p74 = scmp.ne.s32.totalorder %s66, %s69
    %p75 = scmp.eq.s32.totalorder %s9, 0
    %p76 = por %p74, %p75
    %p77 = scmp.ne.s32.totalorder %s66, %s69
    %p78 = scmp.eq.s32.totalorder %s14, 1
    %p79 = por %p77, %p78
    %p80 = scmp.ne.s32.totalorder %s69, %s70
    %p81 = scmp.eq.s32.totalorder %s14, 0
    %p82 = por %p80, %p81
    %p83 = scmp.ne.s32.totalorder %s69, %s70
    %p84 = scmp.eq.s32.totalorder %s15, 1
    %p85 = por %p83, %p84
    %p87 = scmp.ne.s32.totalorder %s70, %s86
    %p88 = scmp.eq.s32.totalorder %s15, 0
    %p89 = por %p87, %p88
    %s90 = ssub.s32 %s17, %s31
    %p91 = scmp.eq.s32.totalorder %s90, 0
    %s93 = sadd.s32 %s92, 1
    %s94 = scalar_select %p91, %s92, %s93
    %p97 = pneg %p91
    %p98 = scmp.eq.s32.totalorder %s9, 1
    %p99 = por %p97, %p98
    %p100 = scmp.ne.s32.totalorder %s92, %s95
    %p101 = scmp.eq.s32.totalorder %s9, 0
    %p102 = por %p100, %p101
    %p103 = scmp.ne.s32.totalorder %s92, %s95
    %p104 = scmp.eq.s32.totalorder %s14, 1
    %p105 = por %p103, %p104
    %p106 = scmp.ne.s32.totalorder %s95, %s96
    %p107 = scmp.eq.s32.totalorder %s14, 0
    %p108 = por %p106, %p107
    %p109 = scmp.ne.s32.totalorder %s95, %s96
    %p110 = scmp.eq.s32.totalorder %s15, 1
    %p111 = por %p109, %p110
    %p113 = scmp.ne.s32.totalorder %s96, %s112
    %p114 = scmp.eq.s32.totalorder %s15, 0
    %p115 = por %p113, %p114
    %s116 = ssub.s32 %s16, %s35
    %s117 = ssub.s32 %s17, %s31
    %s118 = sor.u32 %s116, %s117
    %s119 = ssub.s32 %s18, %s27
    %s120 = sor.u32 %s118, %s119
    %p121 = scmp.eq.s32.totalorder %s120, 0
    %s123 = sadd.s32 %s122, 1
    %s124 = scalar_select %p121, %s122, %s123
    %p127 = pneg %p121
    %p128 = scmp.eq.s32.totalorder %s9, 1
    %p129 = por %p127, %p128
    %p130 = scmp.ne.s32.totalorder %s122, %s125
    %p131 = scmp.eq.s32.totalorder %s9, 0
    %p132 = por %p130, %p131
    %p133 = scmp.ne.s32.totalorder %s122, %s125
    %p134 = scmp.eq.s32.totalorder %s14, 1
    %p135 = por %p133, %p134
    %p136 = scmp.ne.s32.totalorder %s125, %s126
    %p137 = scmp.eq.s32.totalorder %s14, 0
    %p138 = por %p136, %p137
    %p139 = scmp.ne.s32.totalorder %s125, %s126
    %p140 = scmp.eq.s32.totalorder %s15, 1
    %p141 = por %p139, %p140
    %p143 = scmp.ne.s32.totalorder %s126, %s142
    %p144 = scmp.eq.s32.totalorder %s15, 0
    %p145 = por %p143, %p144
    %p146 = scmp.le.s32.totalorder 1, %s9
    %p147 = scmp.lt.s32.totalorder %s9, 3
    %p148 = pnand %p146, %p147
    %p149 = pneg %p148
    // Predicated region
    $region9: #{einops_wrapped_linear.1} parent=5 // pred_check
      _
    $region10: #{einops_wrapped_linear.1} parent=5 // pred_check_branch
      %151 = sbr.rel (%p148) target = $region12
    $region11: #{einops_wrapped_linear.1} parent=5 // pred_region
      %s152 = ssub.s32 %s9, 1
      // Predicated region
      $region13: #{einops_wrapped_linear.1} parent=11 // pred_check
        %p153 = pneg %p82
      $region14: #{einops_wrapped_linear.1} parent=11 // pred_check_branch
        %155 = sbr.rel (%p153) target = $region16
      $region15: #{einops_wrapped_linear.1} parent=11 // pred_region
        %p156 = scmp.lt.s32.totalorder %s20, 0
        %s157 = scalar_select %p156, %s20, 0
        %s158 = smul.addr %s157, 8
        %s159 = scalar_lea.vmem %s1, %s158
      $region16: #{einops_wrapped_linear.1} parent=11 // pred_fallthru
        _
      // Predicated region
      $region17: #{einops_wrapped_linear.1} parent=11 // pred_check
        %p160 = pneg %p108
      $region18: #{einops_wrapped_linear.1} parent=11 // pred_check_branch
        %162 = sbr.rel (%p160) target = $region20
      $region19: #{einops_wrapped_linear.1} parent=11 // pred_region
        %p163 = scmp.lt.s32.totalorder %s20, 0
        %s164 = scalar_select %p163, %s20, 0
        %s165 = smul.addr %s164, 8
        %s166 = scalar_lea.vmem %s2, %s165
      $region20: #{einops_wrapped_linear.1} parent=11 // pred_fallthru
        _
    $region12: #{einops_wrapped_linear.1} parent=5 // pred_fallthru
      _
    %p167 = scmp.lt.s32.totalorder %s9, 2
    // Predicated region
    $region21: #{einops_wrapped_linear.1} parent=5 // pred_check
      %p168 = pneg %p167
    $region22: #{einops_wrapped_linear.1} parent=5 // pred_check_branch
      %170 = sbr.rel (%p168) target = $region24
    $region23: #{einops_wrapped_linear.1} parent=5 // pred_region
      // Predicated region
      $region25: #{einops_wrapped_linear.1} parent=23 // pred_check
        %p171 = pneg %p50
      $region26: #{einops_wrapped_linear.1} parent=23 // pred_check_branch
        %173 = sbr.rel (%p171) target = $region28
      $region27: #{einops_wrapped_linear.1} parent=23 // pred_region
        %s174 = smul.u32 2, %s18
        %p175 = scmp.lt.s32.totalorder %s16, 1
        %s176 = scalar_select %p175, %s16, 1
        %p177 = scmp.lt.s32.totalorder %s174, 1
        %s178 = scalar_select %p177, %s174, 1
        %s179 = smul.addr %s176, 2
        %s180 = sadd.s32 %s178, %s179
        %s181 = smul.addr %s180, 8
        %s182 = scalar_lea.vmem %s0, %s181
        %s183 = smul.u32 2, %s18
      $region28: #{einops_wrapped_linear.1} parent=23 // pred_fallthru
        _
    $region24: #{einops_wrapped_linear.1} parent=5 // pred_fallthru
      _
    %p184 = scmp.le.s32.totalorder 1, %s9
    %p185 = scmp.lt.s32.totalorder %s9, 3
    %p186 = pnand %p184, %p185
    %p187 = pneg %p186
    // Predicated region
    $region29: #{einops_wrapped_linear.1} parent=5 // pred_check
      _
    $region30: #{einops_wrapped_linear.1} parent=5 // pred_check_branch
      %189 = sbr.rel (%p186) target = $region32
    $region31: #{einops_wrapped_linear.1} parent=5 // pred_region
      %s190 = ssub.s32 %s9, 1
      %s191 = smul.u32 2, %s21
      %p192 = scmp.lt.s32.totalorder %s19, 1
      %s193 = scalar_select %p192, %s19, 1
      %p194 = scmp.lt.s32.totalorder %s191, 1
      %s195 = scalar_select %p194, %s191, 1
      %s196 = smul.addr %s193, 2
      %s197 = sadd.s32 %s195, %s196
      %s198 = smul.addr %s197, 8
      %s199 = scalar_lea.vmem %s0, %s198
      %p200 = pneg %p56
      %p201 = pneg %p53
      %p202 = scmp.lt.s32.totalorder %s20, 0
      %s203 = scalar_select %p202, %s20, 0
      %s204 = smul.addr %s203, 8
      %s205 = scalar_lea.vmem %s1, %s204
      %p206 = pneg %p82
      %p207 = pneg %p79
      %p208 = scmp.lt.s32.totalorder %s20, 0
      %s209 = scalar_select %p208, %s20, 0
      %s210 = smul.addr %s209, 8
      %s211 = scalar_lea.vmem %s2, %s210
      %p212 = pneg %p108
      %p213 = pneg %p105
      %p214 = pneg %p138
      %p215 = pneg %p135
      %s216 = smul.u32 2, %s21
      %p217 = scmp.lt.s32.totalorder %s19, 1
      %s218 = scalar_select %p217, %s19, 1
      %p219 = scmp.lt.s32.totalorder %s20, 0
      %s220 = scalar_select %p219, %s20, 0
      %p221 = scmp.lt.s32.totalorder %s216, 1
      %s222 = scalar_select %p221, %s216, 1
      %s223 = smul.addr %s220, 2
      %s224 = sadd.s32 %s222, %s223
      %s225 = smul.addr %s218, 2
      %s226 = sadd.s32 %s224, %s225
      %s227 = smul.addr %s226, 8
      %s228 = scalar_lea.vmem %s3, %s227
      %s229 = smul.u32 2, %s21
      %p230 = scmp.lt.s32.totalorder %s19, 1
      %s231 = scalar_select %p230, %s19, 1
      %p232 = scmp.lt.s32.totalorder %s229, 1
      %s233 = scalar_select %p232, %s229, 1
      %s234 = smul.addr %s231, 2
      %s235 = sadd.s32 %s233, %s234
      %s236 = smul.addr %s235, 8
      %s237 = scalar_lea.vmem %s0, %s236
      %s238 = smul.u32 2, %s21
      %p239 = scmp.lt.s32.totalorder %s20, 0
      %s240 = scalar_select %p239, %s20, 0
      %s241 = smul.addr %s240, 8
      %s242 = scalar_lea.vmem %s1, %s241
      %p243 = scmp.lt.s32.totalorder %s20, 0
      %s244 = scalar_select %p243, %s20, 0
      %s245 = smul.addr %s244, 8
      %s246 = scalar_lea.vmem %s2, %s245
      %s247 = smul.u32 2, %s21
      %p248 = scmp.lt.s32.totalorder %s19, 1
      %s249 = scalar_select %p248, %s19, 1
      %p250 = scmp.lt.s32.totalorder %s20, 0
      %s251 = scalar_select %p250, %s20, 0
      %p252 = scmp.lt.s32.totalorder %s247, 1
      %s253 = scalar_select %p252, %s247, 1
      %s254 = smul.addr %s251, 2
      %s255 = sadd.s32 %s253, %s254
      %s256 = smul.addr %s249, 2
      %s257 = sadd.s32 %s255, %s256
      %s258 = smul.addr %s257, 8
      %s259 = scalar_lea.vmem %s3, %s258
      %s260 = smul.u32 2, %s21
      %v261 = vld [vmem:[%s242] sm:$0xff]
      %v262 = vld [vmem:[%s237] sm:$0xff]
      %v263 = vld [vmem:[%s237 + $0x8] sm:$0xff]
      %v264 = vld [vmem:[%s246] sm:$0xff]
      %266 = vset.pattern.permute.xlu0 0
      %267 = vperm.xlu0 %266, %v264
      %v268 = vpop.permute.xlu0 %267
      %vm270 = vcmask 64512
      %v272 = vsel %vm270, %v261, 0
      %274 = vmatprep.subr.mxu0 %v263
      %275 = vmatpush1.msra.mxu0 %v262
      %276 = vmatprep.subr.mxu0 0.0
      %277 = vmatpush1.msra.mxu0 0.0
      %278 = vmatprep.subr.mxu0 0.0
      %279 = vmatpush1.msra.mxu0 0.0
      %280 = vmatprep.subr.mxu0 0.0
      %281 = vmatpush1.msra.mxu0 0.0
      %282 = vmatprep.subr.mxu0 0.0
      %283 = vmatpush1.msra.mxu0 0.0
      %284 = vmatprep.subr.mxu0 0.0
      %285 = vmatpush1.msra.mxu0 0.0
      %286 = vmatprep.subr.mxu0 0.0
      %287 = vmatpush1.msra.mxu0 0.0
      %288 = vmatprep.subr.mxu0 0.0
      %289 = vmatpush1.msra.mxu0 0.0
      %290 = vmatprep.subr.mxu0 0.0
      %291 = vmatpush1.msra.mxu0 0.0
      %292 = vmatprep.subr.mxu0 0.0
      %293 = vmatpush1.msra.mxu0 0.0
      %294 = vmatprep.subr.mxu0 0.0
      %295 = vmatpush1.msra.mxu0 0.0
      %296 = vmatprep.subr.mxu0 0.0
      %297 = vmatpush1.msra.mxu0 0.0
      %298 = vmatprep.subr.mxu0 0.0
      %299 = vmatpush1.msra.mxu0 0.0
      %300 = vmatprep.subr.mxu0 0.0
      %301 = vmatpush1.msra.mxu0 0.0
      %302 = vmatprep.subr.mxu0 0.0
      %303 = vmatpush1.msra.mxu0 0.0
      %304 = vmatprep.subr.mxu0 0.0
      %305 = vmatpush1.msra.mxu0 0.0
      %306 = vmatprep.subr.mxu0 0.0
      %307 = vmatpush1.msra.mxu0 0.0
      %308 = vmatprep.subr.mxu0 0.0
      %309 = vmatpush1.msra.mxu0 0.0
      %310 = vmatprep.subr.mxu0 0.0
      %311 = vmatpush1.msra.mxu0 0.0
      %312 = vmatprep.subr.mxu0 0.0
      %313 = vmatpush1.msra.mxu0 0.0
      %314 = vmatprep.subr.mxu0 0.0
      %315 = vmatpush1.msra.mxu0 0.0
      %316 = vmatprep.subr.mxu0 0.0
      %317 = vmatpush1.msra.mxu0 0.0
      %318 = vmatprep.subr.mxu0 0.0
      %319 = vmatpush1.msra.mxu0 0.0
      %320 = vmatprep.subr.mxu0 0.0
      %321 = vmatpush1.msra.mxu0 0.0
      %322 = vmatprep.subr.mxu0 0.0
      %323 = vmatpush1.msra.mxu0 0.0
      %324 = vmatprep.subr.mxu0 0.0
      %325 = vmatpush1.msra.mxu0 0.0
      %326 = vmatprep.subr.mxu0 0.0
      %327 = vmatpush1.msra.mxu0 0.0
      %328 = vmatprep.subr.mxu0 0.0
      %329 = vmatpush1.msra.mxu0 0.0
      %330 = vmatprep.subr.mxu0 0.0
      %331 = vmatpush1.msra.mxu0 0.0
      %332 = vmatprep.subr.mxu0 0.0
      %333 = vmatpush1.msra.mxu0 0.0
      %334 = vmatprep.subr.mxu0 0.0
      %335 = vmatpush1.msra.mxu0 0.0
      %336 = vmatprep.subr.mxu0 0.0
      %337 = vmatpush1.msra.mxu0 0.0
      %338 = vmatprep.mubr.f32.mxu0 0.0
      %339 = vmatmul.mubr.f32.gmra.mrb[0].mxu0 %v272
      %v340 = vpop.f32.mrb[0].mxu0
      %v341 = vadd.f32 %v268, %v340
      %v342 = vpop.f32.mrb[0].mxu0
      %v343 = vadd.f32 %v268, %v342
      %344 = vdwg.mxu0
      %345 = vst [vmem:[%s259] sm:$0xff] %v341
      %346 = vst [vmem:[%s259 + $0x8] sm:$0xff] %v343
      %s347 = smul.u32 2, %s21
      %p348 = scmp.lt.s32.totalorder %s19, 1
      %s349 = scalar_select %p348, %s19, 1
      %p350 = scmp.lt.s32.totalorder %s20, 0
      %s351 = scalar_select %p350, %s20, 0
      %p352 = scmp.lt.s32.totalorder %s347, 1
      %s353 = scalar_select %p352, %s347, 1
      %s354 = smul.addr %s351, 2
      %s355 = sadd.s32 %s353, %s354
      %s356 = smul.addr %s349, 2
      %s357 = sadd.s32 %s355, %s356
      %s358 = smul.addr %s357, 8
      %s359 = scalar_lea.vmem %s3, %s358
      // Predicated region
      $region33: #{einops_wrapped_linear.1} parent=31 // pred_check
        %p360 = pneg %p135
      $region34: #{einops_wrapped_linear.1} parent=31 // pred_check_branch
        %362 = sbr.rel (%p360) target = $region36
      $region35: #{einops_wrapped_linear.1} parent=31 // pred_region
        %s363 = smul.u32 2, %s21
      $region36: #{einops_wrapped_linear.1} parent=31 // pred_fallthru
        _
    $region32: #{einops_wrapped_linear.1} parent=5 // pred_fallthru
      _
    %p364 = scmp.le.s32.totalorder 2, %s9
    // Predicated region
    $region37: #{einops_wrapped_linear.1} parent=5 // pred_check
      %p365 = pneg %p364
    $region38: #{einops_wrapped_linear.1} parent=5 // pred_check_branch
      %367 = sbr.rel (%p365) target = $region40
    $region39: #{einops_wrapped_linear.1} parent=5 // pred_region
      %s368 = ssub.s32 %s9, 2
      // Predicated region
      $region41: #{einops_wrapped_linear.1} parent=39 // pred_check
        %p369 = pneg %p141
      $region42: #{einops_wrapped_linear.1} parent=39 // pred_check_branch
        %371 = sbr.rel (%p369) target = $region44
      $region43: #{einops_wrapped_linear.1} parent=39 // pred_region
        %s372 = smul.u32 2, %s24
        %p373 = scmp.lt.s32.totalorder %s22, 1
        %s374 = scalar_select %p373, %s22, 1
        %p375 = scmp.lt.s32.totalorder %s23, 0
        %s376 = scalar_select %p375, %s23, 0
        %p377 = scmp.lt.s32.totalorder %s372, 1
        %s378 = scalar_select %p377, %s372, 1
        %s379 = smul.addr %s376, 2
        %s380 = sadd.s32 %s378, %s379
        %s381 = smul.addr %s374, 2
        %s382 = sadd.s32 %s380, %s381
        %s383 = smul.addr %s382, 8
        %s384 = scalar_lea.vmem %s3, %s383
      $region44: #{einops_wrapped_linear.1} parent=39 // pred_fallthru
        _
    $region40: #{einops_wrapped_linear.1} parent=5 // pred_fallthru
      _
  $region6: #{einops_wrapped_linear.1} parent=0 // loop_footer
    %s13 = sadd.s32 1, %s9
  $region7: #{einops_wrapped_linear.1} parent=0 // loop_footer_branch
    %8 = sbr.rel target = $region3
  $region8: #{einops_wrapped_linear.1} parent=0 // loop_exit
    _

</llo_original>
